<compile_context>
chip_gen: v7x
topology: tpu7x:2x2x1
jax: 0.10.0
libtpu: 0.0.40
codegen_flags: <defaults>
</compile_context>

<pallas_src>
import math
import jax
import jax.numpy as jnp
from jax.experimental import pallas as pl
from jax.experimental.pallas import tpu as pltpu


# ----------------------------------------------------------------------------
# Kernel
# ----------------------------------------------------------------------------
def _linear_kernel(x_ref, w_ref, b_ref, o_ref):
    k = pl.program_id(2)

    @pl.when(k == 0)
    def _():
        # Output tile is resident across the k axis; seed it with the bias so
        # the bias is added exactly once.
        o_ref[...] = jnp.broadcast_to(b_ref[...], o_ref.shape)

    # x tile (tm, tk) @ w tile (tk, tn): canonical MXU contraction, no
    # in-kernel transpose (weights were transposed once in the wrapper).
    o_ref[...] += jnp.dot(
        x_ref[...], w_ref[...], preferred_element_type=jnp.float32
    )


# ----------------------------------------------------------------------------
# Tiling helpers (all static, trace-time Python)
# ----------------------------------------------------------------------------
def _round_up(x, m):
    return ((x + m - 1) // m) * m


def _choose_tile_divisor(dim, unit, max_tile, prefer_multiple_blocks=False):
    """Pick a `unit`-aligned divisor of round_up(dim, unit) as tile size."""
    padded = _round_up(dim, unit)
    divs = [d for d in range(unit, padded + 1, unit) if padded % d == 0]
    cands = [d for d in divs if d <= max_tile]
    tile = max(cands)  # `unit` always divides `padded`, so cands is non-empty
    if prefer_multiple_blocks and tile == padded and padded > unit:
        # Keep >= 2 blocks along this axis (v7x megacore sharding).
        smaller = [d for d in cands if d < padded]
        if smaller:
            tile = max(smaller)
    return tile, padded


def _choose_tm(M, tm_max=1024):
    """Full-M tile when it fits (weights stream from HBM exactly once);
    otherwise pick the multiple-of-8 tile <= tm_max with minimal padding,
    preferring larger tiles (fewer weight re-streams)."""
    Mp8 = _round_up(M, 8)
    if Mp8 <= tm_max:
        return Mp8, Mp8
    cands = [(_round_up(M, t), -t) for t in range(8, tm_max + 1, 8)]
    Mp, neg_t = min(cands)
    return -neg_t, Mp


# ----------------------------------------------------------------------------
# Wrapper
# ----------------------------------------------------------------------------
def prepare_linear_params(weights, bias, *, tn_max=512, tk_max=1024):
    """One-time, per-weight preparation OUTSIDE the hot path:
    pre-transpose to (K, N) and pad to tile multiples."""
    N, K = weights.shape
    tn, Np = _choose_tile_divisor(N, 128, tn_max, prefer_multiple_blocks=True)
    tk, Kp = _choose_tile_divisor(K, 128, tk_max)
    w_t = weights.T  # (K, N): kernel-friendly layout, no in-kernel transpose
    if (Kp, Np) != (K, N):
        w_t = jnp.pad(w_t, ((0, Kp - K), (0, Np - N)))
    b_p = bias if Np == N else jnp.pad(bias, (0, Np - N))
    b_p = b_p.reshape(1, Np)
    return dict(w_t=w_t, b=b_p, N=N, K=K, tn=tn, tk=tk)


def linear_apply(x, params, *, tm_max=1024):
    w_t, b_p = params["w_t"], params["b"]
    N, K = params["N"], params["K"]
    tn, tk = params["tn"], params["tk"]
    Kp, Np = w_t.shape
    M = x.shape[0]
    assert x.shape[1] == K, "x feature dim must match weights' size_in"

    tm, Mp = _choose_tm(M, tm_max)

    # Pad x only when its shape is not already tile-aligned (zeros in the K
    # tail contribute nothing to the accumulation).
    x_p = x if (Mp, Kp) == (M, K) else jnp.pad(x, ((0, Mp - M), (0, Kp - K)))

    grid = (Mp // tm, Np // tn, Kp // tk)

    # Explicit VMEM budget: 2x double-buffered inputs + resident output tile.
    vmem_est = 4 * (2 * tm * tk + 2 * tk * tn + tm * tn + 2 * tn)
    vmem_limit = min(max(int(vmem_est * 1.25) + (2 << 20), 16 << 20), 48 << 20)

    out = pl.pallas_call(
        _linear_kernel,
        out_shape=jax.ShapeDtypeStruct((Mp, Np), jnp.float32),
        grid_spec=pltpu.PrefetchScalarGridSpec(
            num_scalar_prefetch=0,
            grid=grid,
            in_specs=[
                pl.BlockSpec((tm, tk), lambda i, j, k: (i, k)),   # x
                pl.BlockSpec((tk, tn), lambda i, j, k: (k, j)),   # W^T (K, N)
                pl.BlockSpec((1, tn), lambda i, j, k: (0, j)),    # bias
            ],
            out_specs=pl.BlockSpec((tm, tn), lambda i, j, k: (i, j)),
        ),
        compiler_params=pltpu.CompilerParams(
            dimension_semantics=("parallel", "parallel", "arbitrary"),
            vmem_limit_bytes=vmem_limit,
        ),
        cost_estimate=pl.CostEstimate(
            flops=2 * Mp * Np * Kp,
            bytes_accessed=4 * ((Np // tn) * Mp * Kp       # x re-streams
                                + (Mp // tm) * Np * Kp     # weight re-streams
                                + Mp * Np + Np),
            transcendentals=0,
        ),
    )(x_p, w_t, b_p)

    if (Mp, Np) != (M, N):
        out = out[:M, :N]
    return out.astype(x.dtype)


def my_linear_layer(x, weights, bias):
    """Convenience one-shot wrapper (prepares weights on every call; prefer
    prepare_linear_params + linear_apply when weights are reused)."""
    return linear_apply(x, prepare_linear_params(weights, bias))


# ----------------------------------------------------------------------------
# Parameter init mimicking the PyTorch module
# ----------------------------------------------------------------------------
def init_params(key, size_in, size_out):
    """kaiming_uniform_(a=sqrt(5)) on weights -> U(-1/sqrt(fan_in), 1/sqrt(fan_in));
    bias -> U(-1/sqrt(fan_in), 1/sqrt(fan_in))."""
    kw, kb = jax.random.split(key)
    bound = 1.0 / math.sqrt(size_in)
    weights = jax.random.uniform(
        kw, (size_out, size_in), jnp.float32, minval=-bound, maxval=bound
    )
    bias = jax.random.uniform(
        kb, (size_out,), jnp.float32, minval=-bound, maxval=bound
    )
    return weights, bias


if __name__ == "__main__":
    key = jax.random.PRNGKey(0)

    # --- Small shapes matching the module's demo usage ---------------------
    size_in, size_out, batch = 32, 16, 8
    kx, kp = jax.random.split(key)
    x = jax.random.normal(kx, (batch, size_in), dtype=jnp.float32)
    weights, bias = init_params(kp, size_in, size_out)

    params = prepare_linear_params(weights, bias)
    out = jax.block_until_ready(linear_apply(x, params))
    ref = x @ weights.T + bias
    assert out.shape == (batch, size_out)
    assert jnp.allclose(out, ref, atol=1e-5, rtol=1e-5), "small-shape mismatch"

    # --- Medium shapes: multi-tile path, awkward N (320 -> Np=384, tn=128) -
    k1, k2 = jax.random.split(jax.random.PRNGKey(1))
    M2, K2, N2 = 512, 384, 320
    x2 = jax.random.normal(k1, (M2, K2), dtype=jnp.float32)
    w2, b2 = init_params(k2, K2, N2)
    out2 = jax.block_until_ready(my_linear_layer(x2, w2, b2))
    ref2 = x2 @ w2.T + b2
    assert out2.shape == (M2, N2)
    assert jnp.allclose(out2, ref2, atol=1e-4, rtol=1e-4), "tiled-path mismatch"

    # --- Awkward shapes on every axis (exercises padding + slicing) --------
    k3, k4 = jax.random.split(jax.random.PRNGKey(2))
    M3, K3, N3 = 100, 200, 70
    x3 = jax.random.normal(k3, (M3, K3), dtype=jnp.float32)
    w3, b3 = init_params(k4, K3, N3)
    out3 = jax.block_until_ready(my_linear_layer(x3, w3, b3))
    ref3 = x3 @ w3.T + b3
    assert out3.shape == (M3, N3)
    assert jnp.allclose(out3, ref3, atol=1e-4, rtol=1e-4), "padded-path mismatch"

    print("KERNEL_OK")
</pallas_src>

<mosaic_0001>
module attributes {stable_mosaic.version = 11 : i64} {
  func.func @_linear_kernel(%arg0: i32, %arg1: i32, %arg2: i32, %arg3: memref<8x128xf32, #tpu.memory_space<vmem>>, %arg4: memref<128x128xf32, #tpu.memory_space<vmem>>, %arg5: memref<1x128xf32, #tpu.memory_space<vmem>>, %arg6: memref<8x128xf32, #tpu.memory_space<vmem>>) attributes {dimension_semantics = [#tpu.dimension_semantics<parallel>, #tpu.dimension_semantics<parallel>, #tpu.dimension_semantics<arbitrary>], iteration_bounds = array<i64: 1, 1, 1>, scalar_prefetch = 0 : i64, scratch_operands = 0 : i64, tpu.core_type = #tpu.core_type<tc>, window_params = [{transform_indices = @transform_0, window_bounds = array<i64: 8, 128>}, {transform_indices = @transform_1, window_bounds = array<i64: 128, 128>}, {transform_indices = @transform_2, window_bounds = array<i64: 1, 128>}, {transform_indices = @transform_3, window_bounds = array<i64: 8, 128>}]} {
    %c0_i32 = arith.constant 0 : i32
    %0 = arith.cmpi eq, %arg2, %c0_i32 : i32
    %1 = arith.extui %0 : i1 to i32
    %c0_i32_0 = arith.constant 0 : i32
    %2 = arith.cmpi ne, %1, %c0_i32_0 : i32
    scf.if %2 {
      %c0_8 = arith.constant 0 : index
      %c0_9 = arith.constant 0 : index
      %9 = vector.load %arg5[%c0_8, %c0_9] : memref<1x128xf32, #tpu.memory_space<vmem>>, vector<1x128xf32>
      %10 = vector.shape_cast %9 : vector<1x128xf32> to vector<1x128xf32>
      %11 = vector.broadcast %10 : vector<1x128xf32> to vector<8x128xf32>
      %c0_10 = arith.constant 0 : index
      %c0_11 = arith.constant 0 : index
      %12 = vector.load %arg6[%c0_10, %c0_11] : memref<8x128xf32, #tpu.memory_space<vmem>>, vector<8x128xf32>
      tpu.vector_store %arg6[%c0_10, %c0_11], %11 {strides = array<i32>} : memref<8x128xf32, #tpu.memory_space<vmem>>, vector<8x128xf32>,
    } else {
    }
    %c0 = arith.constant 0 : index
    %c0_1 = arith.constant 0 : index
    %3 = vector.load %arg6[%c0, %c0_1] : memref<8x128xf32, #tpu.memory_space<vmem>>, vector<8x128xf32>
    %c0_2 = arith.constant 0 : index
    %c0_3 = arith.constant 0 : index
    %4 = vector.load %arg3[%c0_2, %c0_3] : memref<8x128xf32, #tpu.memory_space<vmem>>, vector<8x128xf32>
    %c0_4 = arith.constant 0 : index
    %c0_5 = arith.constant 0 : index
    %5 = vector.load %arg4[%c0_4, %c0_5] : memref<128x128xf32, #tpu.memory_space<vmem>>, vector<128x128xf32>
    %cst = arith.constant dense<0.000000e+00> : vector<8x128xf32>
    %6 = tpu.matmul %4, %5, %cst {dimension_numbers = #tpu.dot_dimension_numbers<[1], [0], [0], [1], [0, 0, 1, 1], [], []>} : vector<8x128xf32>, vector<128x128xf32>, vector<8x128xf32> -> vector<8x128xf32>
    %7 = arith.addf %3, %6 : vector<8x128xf32>
    %c0_6 = arith.constant 0 : index
    %c0_7 = arith.constant 0 : index
    %8 = vector.load %arg6[%c0_6, %c0_7] : memref<8x128xf32, #tpu.memory_space<vmem>>, vector<8x128xf32>
    tpu.vector_store %arg6[%c0_6, %c0_7], %7 {strides = array<i32>} : memref<8x128xf32, #tpu.memory_space<vmem>>, vector<8x128xf32>,
    return
  }
  func.func @transform_0(%arg0: i32, %arg1: i32, %arg2: i32) -> (i32, i32) {
    %c0_i32 = arith.constant 0 : i32
    return %arg0, %arg2 : i32, i32
  }
  func.func @transform_1(%arg0: i32, %arg1: i32, %arg2: i32) -> (i32, i32) {
    %c0_i32 = arith.constant 0 : i32
    return %arg2, %arg1 : i32, i32
  }
  func.func @transform_2(%arg0: i32, %arg1: i32, %arg2: i32) -> (i32, i32) {
    %c0_i32 = arith.constant 0 : i32
    %c0_i32_0 = arith.constant 0 : i32
    return %c0_i32, %arg1 : i32, i32
  }
  func.func @transform_3(%arg0: i32, %arg1: i32, %arg2: i32) -> (i32, i32) {
    %c0_i32 = arith.constant 0 : i32
    return %arg0, %arg1 : i32, i32
  }
}

</mosaic_0001>

<llo_original>
// kernel: tpu_custom_call.1
$region0: #{tpu_custom_call.1}
  #allocation0 [shape = 'u32[]', space=smem, size = 0x4, offset = 0x4, fixed_abs, tag = 'smem constant byte address 0x4 - core index']
  #allocation1 [shape = 'u32[144,128]{1,0:T(1,128)}', space=vmem, size = 0x12000, scoped, tag = 'internal scratch']
  %s0 = inlined_call_operand.hbm [shape: f32[8,128], index: 0, kind: input, shape index: {}]
  %s1 = inlined_call_operand.hbm [shape: f32[128,128], index: 1, kind: input, shape index: {}]
  %s2 = inlined_call_operand.vmem [shape: f32[1,128], index: 2, kind: input, shape index: {}]
  %s3 = inlined_call_operand.hbm [shape: f32[8,128], index: 3, kind: output, shape index: {}]
  %s4 = sld [smem:[#allocation0]]
  $region34: #{tpu_custom_call.1} parent=0
    _
  %s6 = ssub.s32 1, %s4
  %s7 = scalar_select 0, %s6, %s4
  $region1: #{tpu_custom_call.1} parent=0
    #allocation2 [shape = 'u8[4096]{0}', space=vmem, size = 0x1000, scoped, tag = 'input window, operand 0, single buffered']
    #allocation3 [shape = 's32[1]{0}', space=sflag, size = 0x4, scoped, tag = 'scoped memory for tpu_custom_call.1']
    #allocation4 [shape = 's32[1]{0}', space=sflag, size = 0x4, scoped, tag = 'scoped memory for tpu_custom_call.1']
    #allocation5 [shape = 'u8[65536]{0}', space=vmem, size = 0x10000, scoped, tag = 'input window, operand 1, single buffered']
    #allocation6 [shape = 's32[1]{0}', space=sflag, size = 0x4, scoped, tag = 'scoped memory for tpu_custom_call.1']
    #allocation7 [shape = 'u8[4096]{0}', space=vmem, size = 0x1000, scoped, tag = 'output window, operand 0, single buffered']
    %8 = vsyncpa [#allocation3], 0
    %9 = vsyncpa [#allocation6], 0
    %10 = vsyncpa [#allocation4], 0
    // Predicated region
    $region2: #{tpu_custom_call.1} parent=1 // pred_check
      _
    $region3: #{tpu_custom_call.1} parent=1 // pred_check_branch
      %12 = sbr.rel (0) target = $region5
    $region4: #{tpu_custom_call.1} parent=1 // pred_region
      %s14 = ssub.s32 128, 128
      %15 = vsyncadd [#allocation3], %s14
      %s17 = sshll.u32 [#allocation2], 4
      %s18 = int_to_ptr.vmem [resolvable:$true] %s17
      %20 = dma.hbm_to_vmem [thread:$0]  %s0, 128, %s18, [#allocation3]
    $region5: #{tpu_custom_call.1} parent=1 // pred_fallthru
      _
    // Predicated region
    $region6: #{tpu_custom_call.1} parent=1 // pred_check
      _
    $region7: #{tpu_custom_call.1} parent=1 // pred_check_branch
      %22 = sbr.rel (0) target = $region9
    $region8: #{tpu_custom_call.1} parent=1 // pred_region
      %s24 = ssub.s32 2048, 2048
      %25 = vsyncadd [#allocation6], %s24
      %s26 = sshll.u32 [#allocation5], 4
      %s27 = int_to_ptr.vmem [resolvable:$true] %s26
      %32 = dma.hbm_to_vmem [thread:$0]  %s1, 2048, %s27, [#allocation6], 128, 128, 8
    $region9: #{tpu_custom_call.1} parent=1 // pred_fallthru
      _
    // Predicated region
    $region10: #{tpu_custom_call.1} parent=1 // pred_check
      _
    $region11: #{tpu_custom_call.1} parent=1 // pred_check_branch
      %34 = sbr.rel (0) target = $region13
    $region12: #{tpu_custom_call.1} parent=1 // pred_region
      _
    $region13: #{tpu_custom_call.1} parent=1 // pred_fallthru
      _
    // Predicated region
    $region14: #{tpu_custom_call.1} parent=1 // pred_check
      _
    $region15: #{tpu_custom_call.1} parent=1 // pred_check_branch
      %36 = sbr.rel (0) target = $region17
    $region16: #{tpu_custom_call.1} parent=1 // pred_region
      %37 = dma.done [#allocation3], 128
    $region17: #{tpu_custom_call.1} parent=1 // pred_fallthru
      _
    // Predicated region
    $region18: #{tpu_custom_call.1} parent=1 // pred_check
      _
    $region19: #{tpu_custom_call.1} parent=1 // pred_check_branch
      %39 = sbr.rel (0) target = $region21
    $region20: #{tpu_custom_call.1} parent=1 // pred_region
      %40 = dma.done [#allocation6], 2048
    $region21: #{tpu_custom_call.1} parent=1 // pred_fallthru
      _
    %p41 = scmp.eq.s32.totalorder 0, 0
    // Predicated region
    $region22: #{tpu_custom_call.1} parent=1 // pred_check
      %p42 = pneg %p41
    $region23: #{tpu_custom_call.1} parent=1 // pred_check_branch
      %44 = sbr.rel (%p42) target = $region25
    $region24: #{tpu_custom_call.1} parent=1 // pred_region
      %v45 = vld [vmem:[%s2] sm:$0x1]
      %v47 = vlaneseq
      %v48 = vshrl.u32 %v47, 7
      %v49 = vsub.s32 0, %v48
      %v50 = vrot.slane %v45, %v49
      %52 = vst [vmem:[#allocation7] sm:$0xff] %v50
    $region25: #{tpu_custom_call.1} parent=1 // pred_fallthru
      _
    %v53 = vld [vmem:[#allocation7] sm:$0xff]
    %v54 = vld [vmem:[#allocation2] sm:$0xff]
    %v55 = vld [vmem:[#allocation5] sm:$0xff]
    %v56 = vld [vmem:[#allocation5 + $0x8] sm:$0xff]
    %v57 = vld [vmem:[#allocation5 + $0x10] sm:$0xff]
    %v58 = vld [vmem:[#allocation5 + $0x18] sm:$0xff]
    %v59 = vld [vmem:[#allocation5 + $0x20] sm:$0xff]
    %v60 = vld [vmem:[#allocation5 + $0x28] sm:$0xff]
    %v61 = vld [vmem:[#allocation5 + $0x30] sm:$0xff]
    %v62 = vld [vmem:[#allocation5 + $0x38] sm:$0xff]
    %v63 = vld [vmem:[#allocation5 + $0x40] sm:$0xff]
    %v64 = vld [vmem:[#allocation5 + $0x48] sm:$0xff]
    %v65 = vld [vmem:[#allocation5 + $0x50] sm:$0xff]
    %v66 = vld [vmem:[#allocation5 + $0x58] sm:$0xff]
    %v67 = vld [vmem:[#allocation5 + $0x60] sm:$0xff]
    %v68 = vld [vmem:[#allocation5 + $0x68] sm:$0xff]
    %v69 = vld [vmem:[#allocation5 + $0x70] sm:$0xff]
    %v70 = vld [vmem:[#allocation5 + $0x78] sm:$0xff]
    %71 = vmatprep.subr.mxu0 0.0
    %72 = vmatpush1.msra.mxu0 %v55
    %73 = vmatprep.subr.mxu0 0.0
    %74 = vmatpush1.msra.mxu0 %v56
    %75 = vmatprep.subr.mxu0 0.0
    %76 = vmatpush1.msra.mxu0 %v57
    %77 = vmatprep.subr.mxu0 0.0
    %78 = vmatpush1.msra.mxu0 %v58
    %79 = vmatprep.subr.mxu0 0.0
    %80 = vmatpush1.msra.mxu0 %v59
    %81 = vmatprep.subr.mxu0 0.0
    %82 = vmatpush1.msra.mxu0 %v60
    %83 = vmatprep.subr.mxu0 0.0
    %84 = vmatpush1.msra.mxu0 %v61
    %85 = vmatprep.subr.mxu0 0.0
    %86 = vmatpush1.msra.mxu0 %v62
    %87 = vmatprep.subr.mxu0 0.0
    %88 = vmatpush1.msra.mxu0 %v63
    %89 = vmatprep.subr.mxu0 0.0
    %90 = vmatpush1.msra.mxu0 %v64
    %91 = vmatprep.subr.mxu0 0.0
    %92 = vmatpush1.msra.mxu0 %v65
    %93 = vmatprep.subr.mxu0 0.0
    %94 = vmatpush1.msra.mxu0 %v66
    %95 = vmatprep.subr.mxu0 0.0
    %96 = vmatpush1.msra.mxu0 %v67
    %97 = vmatprep.subr.mxu0 0.0
    %98 = vmatpush1.msra.mxu0 %v68
    %99 = vmatprep.subr.mxu0 0.0
    %100 = vmatpush1.msra.mxu0 %v69
    %101 = vmatprep.subr.mxu0 0.0
    %102 = vmatpush1.msra.mxu0 %v70
    %103 = vmatprep.subr.mxu0 0.0
    %104 = vmatpush1.msra.mxu0 0.0
    %105 = vmatprep.subr.mxu0 0.0
    %106 = vmatpush1.msra.mxu0 0.0
    %107 = vmatprep.subr.mxu0 0.0
    %108 = vmatpush1.msra.mxu0 0.0
    %109 = vmatprep.subr.mxu0 0.0
    %110 = vmatpush1.msra.mxu0 0.0
    %111 = vmatprep.subr.mxu0 0.0
    %112 = vmatpush1.msra.mxu0 0.0
    %113 = vmatprep.subr.mxu0 0.0
    %114 = vmatpush1.msra.mxu0 0.0
    %115 = vmatprep.subr.mxu0 0.0
    %116 = vmatpush1.msra.mxu0 0.0
    %117 = vmatprep.subr.mxu0 0.0
    %118 = vmatpush1.msra.mxu0 0.0
    %119 = vmatprep.subr.mxu0 0.0
    %120 = vmatpush1.msra.mxu0 0.0
    %121 = vmatprep.subr.mxu0 0.0
    %122 = vmatpush1.msra.mxu0 0.0
    %123 = vmatprep.subr.mxu0 0.0
    %124 = vmatpush1.msra.mxu0 0.0
    %125 = vmatprep.subr.mxu0 0.0
    %126 = vmatpush1.msra.mxu0 0.0
    %127 = vmatprep.subr.mxu0 0.0
    %128 = vmatpush1.msra.mxu0 0.0
    %129 = vmatprep.subr.mxu0 0.0
    %130 = vmatpush1.msra.mxu0 0.0
    %131 = vmatprep.subr.mxu0 0.0
    %132 = vmatpush1.msra.mxu0 0.0
    %133 = vmatprep.subr.mxu0 0.0
    %134 = vmatpush1.msra.mxu0 0.0
    %135 = vmatprep.mubr.f32.mxu0 0.0
    %136 = vmatmul.mubr.f32.gmra.mrb[0].mxu0 %v54
    %v137 = vpop.f32.mrb[0].mxu0
    %v138 = vadd.f32 0.0, %v137
    %v139 = vpop.f32.mrb[0].mxu0
    %140 = vdwg.mxu0
    %v141 = vadd.f32 %v53, %v138
    %142 = vst [vmem:[#allocation7] sm:$0xff] %v141
    // Predicated region
    $region26: #{tpu_custom_call.1} parent=1 // pred_check
      _
    $region27: #{tpu_custom_call.1} parent=1 // pred_check_branch
      %144 = sbr.rel (0) target = $region29
    $region28: #{tpu_custom_call.1} parent=1 // pred_region
      %s146 = ssub.s32 128, 128
      %147 = vsyncadd [#allocation4], %s146
      %s149 = sshll.u32 [#allocation7], 4
      %s150 = int_to_ptr.vmem [resolvable:$true] %s149
      %152 = dma.vmem_to_hbm [thread:$0]  %s150, 128, %s3, [#allocation4]
    $region29: #{tpu_custom_call.1} parent=1 // pred_fallthru
      _
    // Predicated region
    $region30: #{tpu_custom_call.1} parent=1 // pred_check
      _
    $region31: #{tpu_custom_call.1} parent=1 // pred_check_branch
      %154 = sbr.rel (0) target = $region33
    $region32: #{tpu_custom_call.1} parent=1 // pred_region
      %155 = dma.done [#allocation4], 128
    $region33: #{tpu_custom_call.1} parent=1 // pred_fallthru
      _
    %156 = vsyncpa [#allocation3], 1
    %157 = vsyncpa [#allocation6], 1
    %158 = vsyncpa [#allocation4], 1

</llo_original>
